<compile_context>
chip_gen: v7x
topology: tpu7x:2x2x1
jax: 0.10.0
libtpu: 0.0.40
codegen_flags: <defaults>
</compile_context>

<pallas_src>
import functools

import jax
import jax.numpy as jnp
from jax.experimental import pallas as pl
from jax.experimental.pallas import tpu as pltpu

LANE = 128  # vreg lane width; feature dims padded to this


def _round_up(n: int, m: int) -> int:
    return ((n + m - 1) // m) * m


def _mlp_kernel(x_ref, w_ref, b_ref, o_ref, act_ref, *,
                n_layers: int, in_features: int, out_features: int):
    """Fused MLP body.

    x_ref  : (batch, in_features)  f32   -- unpadded input
    w_ref  : (L, P, P)             bf16  -- zero-padded weight cube
    b_ref  : (L, 1, P)             f32   -- zero-padded bias slab
    o_ref  : (batch, out_features) f32   -- unpadded output
    act_ref: (batch, P)            f32   -- VMEM scratch for padded activations

    Zero padding is semantics-preserving: padded weight rows/cols and bias
    lanes are zero and ReLU(0) == 0, so extra lanes stay zero through the
    network and are dropped by the final lane slice.
    """
    # Zero-fill the padded activation scratch and drop x into its corner
    # (this replaces the wrapper-side pad HLO).
    act_ref[...] = jnp.zeros_like(act_ref)
    act_ref[:, :in_features] = x_ref[...]

    y = act_ref[...]                                   # (batch, P) f32
    for layer in range(n_layers):                      # static unroll
        w = w_ref[layer]                               # (P, P) bf16
        b = b_ref[layer]                               # (1, P) f32
        # bf16 x bf16 -> f32 accumulation: single MXU pass on v5e/v6e/v7x.
        y = jnp.dot(y.astype(jnp.bfloat16), w,
                    preferred_element_type=jnp.float32)
        y = y + b                                      # f32 VPU bias add
        if layer < n_layers - 1:
            y = jnp.maximum(y, 0.0)                    # f32 ReLU

    # Write the true output shape directly (no wrapper slice HLO).
    o_ref[...] = y[:, :out_features].astype(o_ref.dtype)


def init_fully_connected_params(key, input_size: int, output_size: int,
                                hidden_size: int, n_hidden_layers: int):
    """Deterministic init mirroring torch nn.Linear layer shapes.

    Layers: [in->hidden, (hidden->hidden) * n_hidden_layers, hidden->out].
    Weights stored as (in_features, out_features) (i.e. torch W^T).
    """
    dims = [input_size] + [hidden_size] * (n_hidden_layers + 1) + [output_size]
    params = []
    for i in range(len(dims) - 1):
        key, wk, bk = jax.random.split(key, 3)
        bound = 1.0 / (dims[i] ** 0.5)
        w = jax.random.uniform(wk, (dims[i], dims[i + 1]),
                               minval=-bound, maxval=bound, dtype=jnp.float32)
        b = jax.random.uniform(bk, (dims[i + 1],),
                               minval=-bound, maxval=bound, dtype=jnp.float32)
        params.append((w, b))
    return params


def pack_params_for_tpu(params):
    """Pack every layer into one bf16 weight cube (L, P, P) and one f32 bias
    slab (L, 1, P), with P = max feature dim rounded up to the 128-lane width
    and all padded entries zero.  Done once at parameter-prep time."""
    P = _round_up(max(max(w.shape) for w, _ in params), LANE)
    L = len(params)
    w_stack = jnp.zeros((L, P, P), jnp.float32)
    b_stack = jnp.zeros((L, 1, P), jnp.float32)
    for l, (w, b) in enumerate(params):
        in_f, out_f = w.shape
        w_stack = w_stack.at[l, :in_f, :out_f].set(w)
        b_stack = b_stack.at[l, 0, :out_f].set(b)
    return w_stack.astype(jnp.bfloat16), b_stack


@functools.partial(jax.jit, static_argnames=("output_size",))
def fully_connected_forward(w_stack, b_stack, x, *, output_size: int):
    """Forward pass of FullyConnectedModule via one fused Pallas kernel.

    x: (batch, input_size) f32.  Returns (batch, output_size) f32.
    """
    batch, in_features = x.shape
    n_layers, _, P = w_stack.shape

    kernel = functools.partial(_mlp_kernel, n_layers=n_layers,
                               in_features=in_features,
                               out_features=output_size)

    return pl.pallas_call(
        kernel,
        out_shape=jax.ShapeDtypeStruct((batch, output_size), x.dtype),
        # Whole-array VMEM blocks, no grid: 3 input DMAs + 1 output DMA total.
        in_specs=[pl.BlockSpec(memory_space=pltpu.MemorySpace.VMEM)] * 3,
        out_specs=pl.BlockSpec(memory_space=pltpu.MemorySpace.VMEM),
        scratch_shapes=[pltpu.VMEM((batch, P), jnp.float32)],
    )(x, w_stack, b_stack)


if __name__ == "__main__":
    # Matches the tutorial: x = torch.rand(20, 5); module with
    # input_size=5, output_size=10, hidden_size=32, n_hidden_layers=2.
    input_size, output_size, hidden_size, n_hidden_layers = 5, 10, 32, 2
    batch = 20

    key = jax.random.PRNGKey(0)
    key, xk = jax.random.split(key)
    x = jax.random.uniform(xk, (batch, input_size), dtype=jnp.float32)

    params = init_fully_connected_params(
        key, input_size, output_size, hidden_size, n_hidden_layers)
    w_stack, b_stack = pack_params_for_tpu(params)

    out = fully_connected_forward(w_stack, b_stack, x, output_size=output_size)
    out = jax.block_until_ready(out)

    assert out.shape == (batch, output_size), out.shape
    assert out.dtype == jnp.float32, out.dtype
    assert bool(jnp.all(jnp.isfinite(out))), "non-finite output"

    # Plain-JAX reference with the same numerics (bf16 MXU inputs, f32 accum,
    # f32 bias/ReLU) on the unpadded params.
    ref = x
    for idx, (w, b) in enumerate(params):
        ref = jnp.dot(ref.astype(jnp.bfloat16), w.astype(jnp.bfloat16),
                      preferred_element_type=jnp.float32) + b
        if idx < len(params) - 1:
            ref = jnp.maximum(ref, 0.0)
    assert bool(jnp.allclose(out, ref, atol=1e-3, rtol=1e-3)), "mismatch vs reference"

    print("KERNEL_OK")
</pallas_src>

<mosaic_0001>
module attributes {stable_mosaic.version = 11 : i64} {
  func.func @_mlp_kernel(%arg0: memref<20x5xf32, #tpu.memory_space<vmem>>, %arg1: memref<4x128x128xbf16, #tpu.memory_space<vmem>>, %arg2: memref<4x1x128xf32, #tpu.memory_space<vmem>>, %arg3: memref<20x10xf32, #tpu.memory_space<vmem>>, %arg4: memref<20x128xf32, #tpu.memory_space<vmem>>) attributes {dimension_semantics = [], scalar_prefetch = 0 : i64, scratch_operands = 1 : i64, tpu.core_type = #tpu.core_type<tc>} {
    %cst = arith.constant 0.000000e+00 : f32
    %0 = vector.broadcast %cst : f32 to vector<20x128xf32>
    %c0 = arith.constant 0 : index
    %c0_0 = arith.constant 0 : index
    %1 = vector.load %arg4[%c0, %c0_0] : memref<20x128xf32, #tpu.memory_space<vmem>>, vector<20x128xf32>
    tpu.vector_store %arg4[%c0, %c0_0], %0 {strides = array<i32>} : memref<20x128xf32, #tpu.memory_space<vmem>>, vector<20x128xf32>,
    %c0_1 = arith.constant 0 : index
    %c0_2 = arith.constant 0 : index
    %2 = vector.load %arg0[%c0_1, %c0_2] : memref<20x5xf32, #tpu.memory_space<vmem>>, vector<20x5xf32>
    %c0_3 = arith.constant 0 : index
    %c0_4 = arith.constant 0 : index
    %3 = vector.load %arg4[%c0_3, %c0_4] : memref<20x128xf32, #tpu.memory_space<vmem>>, vector<20x5xf32>
    tpu.vector_store %arg4[%c0_3, %c0_4], %2 {strides = array<i32>} : memref<20x128xf32, #tpu.memory_space<vmem>>, vector<20x5xf32>,
    %c0_5 = arith.constant 0 : index
    %c0_6 = arith.constant 0 : index
    %4 = vector.load %arg4[%c0_5, %c0_6] : memref<20x128xf32, #tpu.memory_space<vmem>>, vector<20x128xf32>
    %c0_7 = arith.constant 0 : index
    %c0_8 = arith.constant 0 : index
    %c0_9 = arith.constant 0 : index
    %5 = vector.load %arg1[%c0_7, %c0_8, %c0_9] : memref<4x128x128xbf16, #tpu.memory_space<vmem>>, vector<1x128x128xbf16>
    %6 = vector.shape_cast %5 : vector<1x128x128xbf16> to vector<128x128xbf16>
    %c0_10 = arith.constant 0 : index
    %c0_11 = arith.constant 0 : index
    %c0_12 = arith.constant 0 : index
    %7 = vector.load %arg2[%c0_10, %c0_11, %c0_12] : memref<4x1x128xf32, #tpu.memory_space<vmem>>, vector<1x1x128xf32>
    %8 = vector.shape_cast %7 : vector<1x1x128xf32> to vector<1x128xf32>
    %9 = arith.truncf %4 : vector<20x128xf32> to vector<20x128xbf16>
    %cst_13 = arith.constant dense<0.000000e+00> : vector<20x128xf32>
    %10 = tpu.matmul %9, %6, %cst_13 {dimension_numbers = #tpu.dot_dimension_numbers<[1], [0], [0], [1], [0, 0, 1, 1], [], []>} : vector<20x128xbf16>, vector<128x128xbf16>, vector<20x128xf32> -> vector<20x128xf32>
    %11 = vector.broadcast %8 : vector<1x128xf32> to vector<20x128xf32>
    %12 = arith.addf %10, %11 : vector<20x128xf32>
    %cst_14 = arith.constant 0.000000e+00 : f32
    %13 = vector.broadcast %cst_14 : f32 to vector<20x128xf32>
    %14 = arith.maximumf %12, %13 : vector<20x128xf32>
    %c1 = arith.constant 1 : index
    %c0_15 = arith.constant 0 : index
    %c0_16 = arith.constant 0 : index
    %15 = vector.load %arg1[%c1, %c0_15, %c0_16] : memref<4x128x128xbf16, #tpu.memory_space<vmem>>, vector<1x128x128xbf16>
    %16 = vector.shape_cast %15 : vector<1x128x128xbf16> to vector<128x128xbf16>
    %c1_17 = arith.constant 1 : index
    %c0_18 = arith.constant 0 : index
    %c0_19 = arith.constant 0 : index
    %17 = vector.load %arg2[%c1_17, %c0_18, %c0_19] : memref<4x1x128xf32, #tpu.memory_space<vmem>>, vector<1x1x128xf32>
    %18 = vector.shape_cast %17 : vector<1x1x128xf32> to vector<1x128xf32>
    %19 = arith.truncf %14 : vector<20x128xf32> to vector<20x128xbf16>
    %cst_20 = arith.constant dense<0.000000e+00> : vector<20x128xf32>
    %20 = tpu.matmul %19, %16, %cst_20 {dimension_numbers = #tpu.dot_dimension_numbers<[1], [0], [0], [1], [0, 0, 1, 1], [], []>} : vector<20x128xbf16>, vector<128x128xbf16>, vector<20x128xf32> -> vector<20x128xf32>
    %21 = vector.broadcast %18 : vector<1x128xf32> to vector<20x128xf32>
    %22 = arith.addf %20, %21 : vector<20x128xf32>
    %cst_21 = arith.constant 0.000000e+00 : f32
    %23 = vector.broadcast %cst_21 : f32 to vector<20x128xf32>
    %24 = arith.maximumf %22, %23 : vector<20x128xf32>
    %c2 = arith.constant 2 : index
    %c0_22 = arith.constant 0 : index
    %c0_23 = arith.constant 0 : index
    %25 = vector.load %arg1[%c2, %c0_22, %c0_23] : memref<4x128x128xbf16, #tpu.memory_space<vmem>>, vector<1x128x128xbf16>
    %26 = vector.shape_cast %25 : vector<1x128x128xbf16> to vector<128x128xbf16>
    %c2_24 = arith.constant 2 : index
    %c0_25 = arith.constant 0 : index
    %c0_26 = arith.constant 0 : index
    %27 = vector.load %arg2[%c2_24, %c0_25, %c0_26] : memref<4x1x128xf32, #tpu.memory_space<vmem>>, vector<1x1x128xf32>
    %28 = vector.shape_cast %27 : vector<1x1x128xf32> to vector<1x128xf32>
    %29 = arith.truncf %24 : vector<20x128xf32> to vector<20x128xbf16>
    %cst_27 = arith.constant dense<0.000000e+00> : vector<20x128xf32>
    %30 = tpu.matmul %29, %26, %cst_27 {dimension_numbers = #tpu.dot_dimension_numbers<[1], [0], [0], [1], [0, 0, 1, 1], [], []>} : vector<20x128xbf16>, vector<128x128xbf16>, vector<20x128xf32> -> vector<20x128xf32>
    %31 = vector.broadcast %28 : vector<1x128xf32> to vector<20x128xf32>
    %32 = arith.addf %30, %31 : vector<20x128xf32>
    %cst_28 = arith.constant 0.000000e+00 : f32
    %33 = vector.broadcast %cst_28 : f32 to vector<20x128xf32>
    %34 = arith.maximumf %32, %33 : vector<20x128xf32>
    %c3 = arith.constant 3 : index
    %c0_29 = arith.constant 0 : index
    %c0_30 = arith.constant 0 : index
    %35 = vector.load %arg1[%c3, %c0_29, %c0_30] : memref<4x128x128xbf16, #tpu.memory_space<vmem>>, vector<1x128x128xbf16>
    %36 = vector.shape_cast %35 : vector<1x128x128xbf16> to vector<128x128xbf16>
    %c3_31 = arith.constant 3 : index
    %c0_32 = arith.constant 0 : index
    %c0_33 = arith.constant 0 : index
    %37 = vector.load %arg2[%c3_31, %c0_32, %c0_33] : memref<4x1x128xf32, #tpu.memory_space<vmem>>, vector<1x1x128xf32>
    %38 = vector.shape_cast %37 : vector<1x1x128xf32> to vector<1x128xf32>
    %39 = arith.truncf %34 : vector<20x128xf32> to vector<20x128xbf16>
    %cst_34 = arith.constant dense<0.000000e+00> : vector<20x128xf32>
    %40 = tpu.matmul %39, %36, %cst_34 {dimension_numbers = #tpu.dot_dimension_numbers<[1], [0], [0], [1], [0, 0, 1, 1], [], []>} : vector<20x128xbf16>, vector<128x128xbf16>, vector<20x128xf32> -> vector<20x128xf32>
    %41 = vector.broadcast %38 : vector<1x128xf32> to vector<20x128xf32>
    %42 = arith.addf %40, %41 : vector<20x128xf32>
    %43 = vector.extract_strided_slice %42 {offsets = [0, 0], sizes = [20, 10], strides = [1, 1]} : vector<20x128xf32> to vector<20x10xf32>
    %c0_35 = arith.constant 0 : index
    %c0_36 = arith.constant 0 : index
    %44 = vector.load %arg3[%c0_35, %c0_36] : memref<20x10xf32, #tpu.memory_space<vmem>>, vector<20x10xf32>
    tpu.vector_store %arg3[%c0_35, %c0_36], %43 {strides = array<i32>} : memref<20x10xf32, #tpu.memory_space<vmem>>, vector<20x10xf32>,
    return
  }
}

</mosaic_0001>

<llo_original>
// kernel: fully_connected_forward.1
$region0: #{fully_connected_forward.1}
  #allocation0 [shape = 'u32[]', space=smem, size = 0x4, offset = 0x4, fixed_abs, tag = 'smem constant byte address 0x4 - core index']
  #allocation1 [shape = 'u32[144,128]{1,0:T(1,128)}', space=vmem, size = 0x12000, scoped, tag = 'internal scratch']
  #allocation2 [shape = 'f32[20,128]{1,0:T(8,128)}', space=vmem, size = 0x3000, scoped, tag = 'scratch operand']
  %s0 = inlined_call_operand.vmem [shape: f32[20,5], index: 0, kind: input, shape index: {}]
  %s1 = inlined_call_operand.hbm [shape: bf16[4,128,128], index: 1, kind: input, shape index: {}]
  %s2 = inlined_call_operand.vmem [shape: f32[4,1,128], index: 2, kind: input, shape index: {}]
  %s3 = inlined_call_operand.vmem [shape: f32[20,10], index: 3, kind: output, shape index: {}]
  %s4 = sld [smem:[#allocation0]]
  $region26: #{fully_connected_forward.1} parent=0
    _
  %s6 = ssub.s32 1, %s4
  %s7 = scalar_select 0, %s6, %s4
  $region1: #{fully_connected_forward.1} parent=0
    #allocation3 [shape = 'u8[131072]{0}', space=vmem, size = 0x20000, scoped, tag = 'input window, operand 1, single buffered']
    #allocation4 [shape = 's32[1]{0}', space=sflag, size = 0x4, scoped, tag = 'scoped memory for fully_connected_forward.1']
    %8 = vsyncpa [#allocation4], 0
    // Predicated region
    $region2: #{fully_connected_forward.1} parent=1 // pred_check
      _
    $region3: #{fully_connected_forward.1} parent=1 // pred_check_branch
      %10 = sbr.rel (0) target = $region5
    $region4: #{fully_connected_forward.1} parent=1 // pred_region
      _
    $region5: #{fully_connected_forward.1} parent=1 // pred_fallthru
      _
    // Predicated region
    $region6: #{fully_connected_forward.1} parent=1 // pred_check
      _
    $region7: #{fully_connected_forward.1} parent=1 // pred_check_branch
      %12 = sbr.rel (0) target = $region9
    $region8: #{fully_connected_forward.1} parent=1 // pred_region
      %s14 = ssub.s32 4096, 4096
      %15 = vsyncadd [#allocation4], %s14
      %s16 = sshll.u32 [#allocation3], 4
      %s17 = int_to_ptr.vmem [resolvable:$true] %s16
      %22 = dma.hbm_to_vmem [thread:$0]  %s1, 4096, %s17, [#allocation4], 64, 64, 4
    $region9: #{fully_connected_forward.1} parent=1 // pred_fallthru
      _
    // Predicated region
    $region10: #{fully_connected_forward.1} parent=1 // pred_check
      _
    $region11: #{fully_connected_forward.1} parent=1 // pred_check_branch
      %24 = sbr.rel (0) target = $region13
    $region12: #{fully_connected_forward.1} parent=1 // pred_region
      _
    $region13: #{fully_connected_forward.1} parent=1 // pred_fallthru
      _
    // Predicated region
    $region14: #{fully_connected_forward.1} parent=1 // pred_check
      _
    $region15: #{fully_connected_forward.1} parent=1 // pred_check_branch
      %26 = sbr.rel (0) target = $region17
    $region16: #{fully_connected_forward.1} parent=1 // pred_region
      %27 = dma.done [#allocation4], 4096
    $region17: #{fully_connected_forward.1} parent=1 // pred_fallthru
      _
    %29 = vst [vmem:[#allocation2] sm:$0xff] 0.0
    %30 = vst [vmem:[#allocation2 + $0x8] sm:$0xff] 0.0
    %31 = vst [vmem:[#allocation2 + $0x10] sm:$0xf] 0.0
    %v32 = vld [vmem:[%s0] sm:$0xff]
    %v33 = vld [vmem:[%s0 + $0x8] sm:$0xff]
    %v34 = vld [vmem:[%s0 + $0x10] sm:$0xf]
    %vm35 = vcmask 39936
    %36 = vst.msk [vmem:[#allocation2] sm:$0xff] %vm35, %v32
    %37 = vst.msk [vmem:[#allocation2 + $0x8] sm:$0xff] %vm35, %v33
    %vm38 = vcmask 35840
    %39 = vst.msk [vmem:[#allocation2 + $0x10] sm:$0xf] %vm38, %v34
    %v40 = vld [vmem:[#allocation2] sm:$0xff]
    %v41 = vld [vmem:[#allocation2 + $0x8] sm:$0xff]
    %v42 = vld [vmem:[#allocation2 + $0x10] sm:$0xf]
    %v43 = vld [vmem:[#allocation3] sm:$0xf]
    %v44 = vld [vmem:[#allocation3 + $0x4] sm:$0xf]
    %v45 = vld [vmem:[#allocation3 + $0x8] sm:$0xf]
    %v46 = vld [vmem:[#allocation3 + $0xc] sm:$0xf]
    %v47 = vld [vmem:[#allocation3 + $0x10] sm:$0xf]
    %v48 = vld [vmem:[#allocation3 + $0x14] sm:$0xf]
    %v49 = vld [vmem:[#allocation3 + $0x18] sm:$0xf]
    %v50 = vld [vmem:[#allocation3 + $0x1c] sm:$0xf]
    %v51 = vld [vmem:[#allocation3 + $0x20] sm:$0xf]
    %v52 = vld [vmem:[#allocation3 + $0x24] sm:$0xf]
    %v53 = vld [vmem:[#allocation3 + $0x28] sm:$0xf]
    %v54 = vld [vmem:[#allocation3 + $0x2c] sm:$0xf]
    %v55 = vld [vmem:[#allocation3 + $0x30] sm:$0xf]
    %v56 = vld [vmem:[#allocation3 + $0x34] sm:$0xf]
    %v57 = vld [vmem:[#allocation3 + $0x38] sm:$0xf]
    %v58 = vld [vmem:[#allocation3 + $0x3c] sm:$0xf]
    %v59 = vld [vmem:[%s2] sm:$0x1]
    %v60 = vpack.c.bf16 %v41, %v40
    %v61 = vpack.c.bf16 %v42, %v42
    %v63 = vlaneseq
    %v64 = vshrl.u32 %v63, 7
    %v65 = vsub.s32 0, %v64
    %v66 = vrot.slane %v59, %v65
    %v84 = vunpack.c.l.b16 %v43
    %v85 = vunpack.c.l.b16 %v44
    %v86 = vunpack.c.l.b16 %v45
    %v87 = vunpack.c.l.b16 %v46
    %v88 = vunpack.c.l.b16 %v47
    %v89 = vunpack.c.l.b16 %v48
    %v90 = vunpack.c.l.b16 %v49
    %v91 = vunpack.c.l.b16 %v50
    %v92 = vunpack.c.l.b16 %v51
    %v93 = vunpack.c.l.b16 %v52
    %v94 = vunpack.c.l.b16 %v53
    %v95 = vunpack.c.l.b16 %v54
    %v96 = vunpack.c.l.b16 %v55
    %v97 = vunpack.c.l.b16 %v56
    %v98 = vunpack.c.l.b16 %v57
    %v99 = vunpack.c.l.b16 %v58
    %v100 = vpack.c.b16 %v85, %v84
    %v101 = vpack.c.b16 %v87, %v86
    %v102 = vpack.c.b16 %v89, %v88
    %v103 = vpack.c.b16 %v91, %v90
    %v104 = vpack.c.b16 %v93, %v92
    %v105 = vpack.c.b16 %v95, %v94
    %v106 = vpack.c.b16 %v97, %v96
    %v107 = vpack.c.b16 %v99, %v98
    %116 = vmatprep.subr.bf16.mxu0 0
    %117 = vmatpush1.bf16.msra.mxu0 %v100
    %118 = vmatprep.subr.bf16.mxu0 0
    %119 = vmatpush1.bf16.msra.mxu0 %v101
    %120 = vmatprep.subr.bf16.mxu0 0
    %121 = vmatpush1.bf16.msra.mxu0 %v102
    %122 = vmatprep.subr.bf16.mxu0 0
    %123 = vmatpush1.bf16.msra.mxu0 %v103
    %124 = vmatprep.subr.bf16.mxu0 0
    %125 = vmatpush1.bf16.msra.mxu0 %v104
    %126 = vmatprep.subr.bf16.mxu0 0
    %127 = vmatpush1.bf16.msra.mxu0 %v105
    %128 = vmatprep.subr.bf16.mxu0 0
    %129 = vmatpush1.bf16.msra.mxu0 %v106
    %130 = vmatprep.subr.bf16.mxu0 0
    %131 = vmatpush1.bf16.msra.mxu0 %v107
    %132 = vmatprep.subr.bf16.mxu0 0
    %133 = vmatpush1.bf16.msra.mxu0 0
    %134 = vmatprep.subr.bf16.mxu0 0
    %135 = vmatpush1.bf16.msra.mxu0 0
    %136 = vmatprep.subr.bf16.mxu0 0
    %137 = vmatpush1.bf16.msra.mxu0 0
    %138 = vmatprep.subr.bf16.mxu0 0
    %139 = vmatpush1.bf16.msra.mxu0 0
    %140 = vmatprep.subr.bf16.mxu0 0
    %141 = vmatpush1.bf16.msra.mxu0 0
    %142 = vmatprep.subr.bf16.mxu0 0
    %143 = vmatpush1.bf16.msra.mxu0 0
    %144 = vmatprep.subr.bf16.mxu0 0
    %145 = vmatpush1.bf16.msra.mxu0 0
    %146 = vmatprep.subr.bf16.mxu0 0
    %147 = vmatpush1.bf16.msra.mxu0 0
    %148 = vmatprep.mubr.bf16.mxu0 0
    %149 = vmatmul.mubr.bf16.gmra.mrb[0].mxu0 %v60
    %v150 = vpop.f32.mrb[0].mxu0
    %v151 = vadd.f32 %v66, %v150
    %v152 = vpop.f32.mrb[0].mxu0
    %v153 = vpop.f32.mrb[0].mxu0
    %v154 = vadd.f32 %v66, %v153
    %v155 = vpop.f32.mrb[0].mxu0
    %156 = vmatprep.mubr.bf16.mxu0 0
    %157 = vmatmul.mubr.bf16.gmra.mrb[0].mxu0 %v61
    %v158 = vpop.f32.mrb[0].mxu0
    %v159 = vadd.f32 %v66, %v158
    %v160 = vpop.f32.mrb[0].mxu0
    %v161 = vpop.f32.mrb[0].mxu0
    %v162 = vpop.f32.mrb[0].mxu0
    %163 = vdwg.mxu0
    %v164 = vmax.f32 %v151, 0.0
    %v165 = vmax.f32 %v154, 0.0
    %v166 = vmax.f32 %v159, 0.0
    %s167 = scalar_lea.vmem [#allocation3], 64
    %v168 = vld [vmem:[%s167] sm:$0xf]
    %v169 = vld [vmem:[%s167 + $0x4] sm:$0xf]
    %v170 = vld [vmem:[%s167 + $0x8] sm:$0xf]
    %v171 = vld [vmem:[%s167 + $0xc] sm:$0xf]
    %v172 = vld [vmem:[%s167 + $0x10] sm:$0xf]
    %v173 = vld [vmem:[%s167 + $0x14] sm:$0xf]
    %v174 = vld [vmem:[%s167 + $0x18] sm:$0xf]
    %v175 = vld [vmem:[%s167 + $0x1c] sm:$0xf]
    %v176 = vld [vmem:[%s167 + $0x20] sm:$0xf]
    %v177 = vld [vmem:[%s167 + $0x24] sm:$0xf]
    %v178 = vld [vmem:[%s167 + $0x28] sm:$0xf]
    %v179 = vld [vmem:[%s167 + $0x2c] sm:$0xf]
    %v180 = vld [vmem:[%s167 + $0x30] sm:$0xf]
    %v181 = vld [vmem:[%s167 + $0x34] sm:$0xf]
    %v182 = vld [vmem:[%s167 + $0x38] sm:$0xf]
    %v183 = vld [vmem:[%s167 + $0x3c] sm:$0xf]
    %s184 = scalar_lea.vmem %s2, 1
    %v185 = vld [vmem:[%s184] sm:$0x1]
    %v186 = vpack.c.bf16 %v165, %v164
    %v187 = vpack.c.bf16 %v166, %v166
    %v189 = vlaneseq
    %v190 = vshrl.u32 %v189, 7
    %v191 = vsub.s32 0, %v190
    %v192 = vrot.slane %v185, %v191
    %v210 = vunpack.c.l.b16 %v168
    %v211 = vunpack.c.l.b16 %v169
    %v212 = vunpack.c.l.b16 %v170
    %v213 = vunpack.c.l.b16 %v171
    %v214 = vunpack.c.l.b16 %v172
    %v215 = vunpack.c.l.b16 %v173
    %v216 = vunpack.c.l.b16 %v174
    %v217 = vunpack.c.l.b16 %v175
    %v218 = vunpack.c.l.b16 %v176
    %v219 = vunpack.c.l.b16 %v177
    %v220 = vunpack.c.l.b16 %v178
    %v221 = vunpack.c.l.b16 %v179
    %v222 = vunpack.c.l.b16 %v180
    %v223 = vunpack.c.l.b16 %v181
    %v224 = vunpack.c.l.b16 %v182
    %v225 = vunpack.c.l.b16 %v183
    %v226 = vpack.c.b16 %v211, %v210
    %v227 = vpack.c.b16 %v213, %v212
    %v228 = vpack.c.b16 %v215, %v214
    %v229 = vpack.c.b16 %v217, %v216
    %v230 = vpack.c.b16 %v219, %v218
    %v231 = vpack.c.b16 %v221, %v220
    %v232 = vpack.c.b16 %v223, %v222
    %v233 = vpack.c.b16 %v225, %v224
    %242 = vmatprep.subr.bf16.mxu0 0
    %243 = vmatpush1.bf16.msra.mxu0 %v226
    %244 = vmatprep.subr.bf16.mxu0 0
    %245 = vmatpush1.bf16.msra.mxu0 %v227
    %246 = vmatprep.subr.bf16.mxu0 0
    %247 = vmatpush1.bf16.msra.mxu0 %v228
    %248 = vmatprep.subr.bf16.mxu0 0
    %249 = vmatpush1.bf16.msra.mxu0 %v229
    %250 = vmatprep.subr.bf16.mxu0 0
    %251 = vmatpush1.bf16.msra.mxu0 %v230
    %252 = vmatprep.subr.bf16.mxu0 0
    %253 = vmatpush1.bf16.msra.mxu0 %v231
    %254 = vmatprep.subr.bf16.mxu0 0
    %255 = vmatpush1.bf16.msra.mxu0 %v232
    %256 = vmatprep.subr.bf16.mxu0 0
    %257 = vmatpush1.bf16.msra.mxu0 %v233
    %258 = vmatprep.subr.bf16.mxu0 0
    %259 = vmatpush1.bf16.msra.mxu0 0
    %260 = vmatprep.subr.bf16.mxu0 0
    %261 = vmatpush1.bf16.msra.mxu0 0
    %262 = vmatprep.subr.bf16.mxu0 0
    %263 = vmatpush1.bf16.msra.mxu0 0
    %264 = vmatprep.subr.bf16.mxu0 0
    %265 = vmatpush1.bf16.msra.mxu0 0
    %266 = vmatprep.subr.bf16.mxu0 0
    %267 = vmatpush1.bf16.msra.mxu0 0
    %268 = vmatprep.subr.bf16.mxu0 0
    %269 = vmatpush1.bf16.msra.mxu0 0
    %270 = vmatprep.subr.bf16.mxu0 0
    %271 = vmatpush1.bf16.msra.mxu0 0
    %272 = vmatprep.subr.bf16.mxu0 0
    %273 = vmatpush1.bf16.msra.mxu0 0
    %274 = vmatprep.mubr.bf16.mxu0 0
    %275 = vmatmul.mubr.bf16.gmra.mrb[0].mxu0 %v186
    %v276 = vpop.f32.mrb[0].mxu0
    %v277 = vadd.f32 %v192, %v276
    %v278 = vpop.f32.mrb[0].mxu0
    %v279 = vpop.f32.mrb[0].mxu0
    %v280 = vadd.f32 %v192, %v279
    %v281 = vpop.f32.mrb[0].mxu0
    %282 = vmatprep.mubr.bf16.mxu0 0
    %283 = vmatmul.mubr.bf16.gmra.mrb[0].mxu0 %v187
    %v284 = vpop.f32.mrb[0].mxu0
    %v285 = vadd.f32 %v192, %v284
    %v286 = vpop.f32.mrb[0].mxu0
    %v287 = vpop.f32.mrb[0].mxu0
    %v288 = vpop.f32.mrb[0].mxu0
    %289 = vdwg.mxu0
    %v290 = vmax.f32 %v277, 0.0
    %v291 = vmax.f32 %v280, 0.0
    %v292 = vmax.f32 %v285, 0.0
    %s293 = scalar_lea.vmem [#allocation3], 128
    %v294 = vld [vmem:[%s293] sm:$0xf]
    %v295 = vld [vmem:[%s293 + $0x4] sm:$0xf]
    %v296 = vld [vmem:[%s293 + $0x8] sm:$0xf]
    %v297 = vld [vmem:[%s293 + $0xc] sm:$0xf]
    %v298 = vld [vmem:[%s293 + $0x10] sm:$0xf]
    %v299 = vld [vmem:[%s293 + $0x14] sm:$0xf]
    %v300 = vld [vmem:[%s293 + $0x18] sm:$0xf]
    %v301 = vld [vmem:[%s293 + $0x1c] sm:$0xf]
    %v302 = vld [vmem:[%s293 + $0x20] sm:$0xf]
    %v303 = vld [vmem:[%s293 + $0x24] sm:$0xf]
    %v304 = vld [vmem:[%s293 + $0x28] sm:$0xf]
    %v305 = vld [vmem:[%s293 + $0x2c] sm:$0xf]
    %v306 = vld [vmem:[%s293 + $0x30] sm:$0xf]
    %v307 = vld [vmem:[%s293 + $0x34] sm:$0xf]
    %v308 = vld [vmem:[%s293 + $0x38] sm:$0xf]
    %v309 = vld [vmem:[%s293 + $0x3c] sm:$0xf]
    %s310 = scalar_lea.vmem %s2, 2
    %v311 = vld [vmem:[%s310] sm:$0x1]
    %v312 = vpack.c.bf16 %v291, %v290
    %v313 = vpack.c.bf16 %v292, %v292
    %v315 = vlaneseq
    %v316 = vshrl.u32 %v315, 7
    %v317 = vsub.s32 0, %v316
    %v318 = vrot.slane %v311, %v317
    %v336 = vunpack.c.l.b16 %v294
    %v337 = vunpack.c.l.b16 %v295
    %v338 = vunpack.c.l.b16 %v296
    %v339 = vunpack.c.l.b16 %v297
    %v340 = vunpack.c.l.b16 %v298
    %v341 = vunpack.c.l.b16 %v299
    %v342 = vunpack.c.l.b16 %v300
    %v343 = vunpack.c.l.b16 %v301
    %v344 = vunpack.c.l.b16 %v302
    %v345 = vunpack.c.l.b16 %v303
    %v346 = vunpack.c.l.b16 %v304
    %v347 = vunpack.c.l.b16 %v305
    %v348 = vunpack.c.l.b16 %v306
    %v349 = vunpack.c.l.b16 %v307
    %v350 = vunpack.c.l.b16 %v308
    %v351 = vunpack.c.l.b16 %v309
    %v352 = vpack.c.b16 %v337, %v336
    %v353 = vpack.c.b16 %v339, %v338
    %v354 = vpack.c.b16 %v341, %v340
    %v355 = vpack.c.b16 %v343, %v342
    %v356 = vpack.c.b16 %v345, %v344
    %v357 = vpack.c.b16 %v347, %v346
    %v358 = vpack.c.b16 %v349, %v348
    %v359 = vpack.c.b16 %v351, %v350
    %368 = vmatprep.subr.bf16.mxu0 0
    %369 = vmatpush1.bf16.msra.mxu0 %v352
    %370 = vmatprep.subr.bf16.mxu0 0
    %371 = vmatpush1.bf16.msra.mxu0 %v353
    %372 = vmatprep.subr.bf16.mxu0 0
    %373 = vmatpush1.bf16.msra.mxu0 %v354
    %374 = vmatprep.subr.bf16.mxu0 0
    %375 = vmatpush1.bf16.msra.mxu0 %v355
    %376 = vmatprep.subr.bf16.mxu0 0
    %377 = vmatpush1.bf16.msra.mxu0 %v356
    %378 = vmatprep.subr.bf16.mxu0 0
    %379 = vmatpush1.bf16.msra.mxu0 %v357
    %380 = vmatprep.subr.bf16.mxu0 0
    %381 = vmatpush1.bf16.msra.mxu0 %v358
    %382 = vmatprep.subr.bf16.mxu0 0
    %383 = vmatpush1.bf16.msra.mxu0 %v359
    %384 = vmatprep.subr.bf16.mxu0 0
    %385 = vmatpush1.bf16.msra.mxu0 0
    %386 = vmatprep.subr.bf16.mxu0 0
    %387 = vmatpush1.bf16.msra.mxu0 0
    %388 = vmatprep.subr.bf16.mxu0 0
    %389 = vmatpush1.bf16.msra.mxu0 0
    %390 = vmatprep.subr.bf16.mxu0 0
    %391 = vmatpush1.bf16.msra.mxu0 0
    %392 = vmatprep.subr.bf16.mxu0 0
    %393 = vmatpush1.bf16.msra.mxu0 0
    %394 = vmatprep.subr.bf16.mxu0 0
    %395 = vmatpush1.bf16.msra.mxu0 0
    %396 = vmatprep.subr.bf16.mxu0 0
    %397 = vmatpush1.bf16.msra.mxu0 0
    %398 = vmatprep.subr.bf16.mxu0 0
    %399 = vmatpush1.bf16.msra.mxu0 0
    %400 = vmatprep.mubr.bf16.mxu0 0
    %401 = vmatmul.mubr.bf16.gmra.mrb[0].mxu0 %v312
    %v402 = vpop.f32.mrb[0].mxu0
    %v403 = vadd.f32 %v318, %v402
    %v404 = vpop.f32.mrb[0].mxu0
    %v405 = vpop.f32.mrb[0].mxu0
    %v406 = vadd.f32 %v318, %v405
    %v407 = vpop.f32.mrb[0].mxu0
    %408 = vmatprep.mubr.bf16.mxu0 0
    %409 = vmatmul.mubr.bf16.gmra.mrb[0].mxu0 %v313
    %v410 = vpop.f32.mrb[0].mxu0
    %v411 = vadd.f32 %v318, %v410
    %v412 = vpop.f32.mrb[0].mxu0
    %v413 = vpop.f32.mrb[0].mxu0
    %v414 = vpop.f32.mrb[0].mxu0
    %415 = vdwg.mxu0
    %v416 = vmax.f32 %v403, 0.0
    %v417 = vmax.f32 %v406, 0.0
    %v418 = vmax.f32 %v411, 0.0
    %s419 = scalar_lea.vmem [#allocation3], 192
    %v420 = vld [vmem:[%s419] sm:$0xf]
    %v421 = vld [vmem:[%s419 + $0x4] sm:$0xf]
    %v422 = vld [vmem:[%s419 + $0x8] sm:$0xf]
    %v423 = vld [vmem:[%s419 + $0xc] sm:$0xf]
    %v424 = vld [vmem:[%s419 + $0x10] sm:$0xf]
    %v425 = vld [vmem:[%s419 + $0x14] sm:$0xf]
    %v426 = vld [vmem:[%s419 + $0x18] sm:$0xf]
    %v427 = vld [vmem:[%s419 + $0x1c] sm:$0xf]
    %v428 = vld [vmem:[%s419 + $0x20] sm:$0xf]
    %v429 = vld [vmem:[%s419 + $0x24] sm:$0xf]
    %v430 = vld [vmem:[%s419 + $0x28] sm:$0xf]
    %v431 = vld [vmem:[%s419 + $0x2c] sm:$0xf]
    %v432 = vld [vmem:[%s419 + $0x30] sm:$0xf]
    %v433 = vld [vmem:[%s419 + $0x34] sm:$0xf]
    %v434 = vld [vmem:[%s419 + $0x38] sm:$0xf]
    %v435 = vld [vmem:[%s419 + $0x3c] sm:$0xf]
    %s436 = scalar_lea.vmem %s2, 3
    %v437 = vld [vmem:[%s436] sm:$0x1]
    %v438 = vpack.c.bf16 %v417, %v416
    %v439 = vpack.c.bf16 %v418, %v418
    %v441 = vlaneseq
    %v442 = vshrl.u32 %v441, 7
    %v443 = vsub.s32 0, %v442
    %v444 = vrot.slane %v437, %v443
    %v462 = vunpack.c.l.b16 %v420
    %v463 = vunpack.c.l.b16 %v421
    %v464 = vunpack.c.l.b16 %v422
    %v465 = vunpack.c.l.b16 %v423
    %v466 = vunpack.c.l.b16 %v424
    %v467 = vunpack.c.l.b16 %v425
    %v468 = vunpack.c.l.b16 %v426
    %v469 = vunpack.c.l.b16 %v427
    %v470 = vunpack.c.l.b16 %v428
    %v471 = vunpack.c.l.b16 %v429
    %v472 = vunpack.c.l.b16 %v430
    %v473 = vunpack.c.l.b16 %v431
    %v474 = vunpack.c.l.b16 %v432
    %v475 = vunpack.c.l.b16 %v433
    %v476 = vunpack.c.l.b16 %v434
    %v477 = vunpack.c.l.b16 %v435
    %v478 = vpack.c.b16 %v463, %v462
    %v479 = vpack.c.b16 %v465, %v464
    %v480 = vpack.c.b16 %v467, %v466
    %v481 = vpack.c.b16 %v469, %v468
    %v482 = vpack.c.b16 %v471, %v470
    %v483 = vpack.c.b16 %v473, %v472
    %v484 = vpack.c.b16 %v475, %v474
    %v485 = vpack.c.b16 %v477, %v476
    %494 = vmatprep.subr.bf16.mxu0 0
    %495 = vmatpush1.bf16.msra.mxu0 %v478
    %496 = vmatprep.subr.bf16.mxu0 0
    %497 = vmatpush1.bf16.msra.mxu0 %v479
    %498 = vmatprep.subr.bf16.mxu0 0
    %499 = vmatpush1.bf16.msra.mxu0 %v480
    %500 = vmatprep.subr.bf16.mxu0 0
    %501 = vmatpush1.bf16.msra.mxu0 %v481
    %502 = vmatprep.subr.bf16.mxu0 0
    %503 = vmatpush1.bf16.msra.mxu0 %v482
    %504 = vmatprep.subr.bf16.mxu0 0
    %505 = vmatpush1.bf16.msra.mxu0 %v483
    %506 = vmatprep.subr.bf16.mxu0 0
    %507 = vmatpush1.bf16.msra.mxu0 %v484
    %508 = vmatprep.subr.bf16.mxu0 0
    %509 = vmatpush1.bf16.msra.mxu0 %v485
    %510 = vmatprep.subr.bf16.mxu0 0
    %511 = vmatpush1.bf16.msra.mxu0 0
    %512 = vmatprep.subr.bf16.mxu0 0
    %513 = vmatpush1.bf16.msra.mxu0 0
    %514 = vmatprep.subr.bf16.mxu0 0
    %515 = vmatpush1.bf16.msra.mxu0 0
    %516 = vmatprep.subr.bf16.mxu0 0
    %517 = vmatpush1.bf16.msra.mxu0 0
    %518 = vmatprep.subr.bf16.mxu0 0
    %519 = vmatpush1.bf16.msra.mxu0 0
    %520 = vmatprep.subr.bf16.mxu0 0
    %521 = vmatpush1.bf16.msra.mxu0 0
    %522 = vmatprep.subr.bf16.mxu0 0
    %523 = vmatpush1.bf16.msra.mxu0 0
    %524 = vmatprep.subr.bf16.mxu0 0
    %525 = vmatpush1.bf16.msra.mxu0 0
    %526 = vmatprep.mubr.bf16.mxu0 0
    %527 = vmatmul.mubr.bf16.gmra.mrb[0].mxu0 %v438
    %v528 = vpop.f32.mrb[0].mxu0
    %v529 = vadd.f32 %v444, %v528
    %v530 = vpop.f32.mrb[0].mxu0
    %v531 = vpop.f32.mrb[0].mxu0
    %v532 = vadd.f32 %v444, %v531
    %v533 = vpop.f32.mrb[0].mxu0
    %534 = vmatprep.mubr.bf16.mxu0 0
    %535 = vmatmul.mubr.bf16.gmra.mrb[0].mxu0 %v439
    %v536 = vpop.f32.mrb[0].mxu0
    %v537 = vadd.f32 %v444, %v536
    %v538 = vpop.f32.mrb[0].mxu0
    %v539 = vpop.f32.mrb[0].mxu0
    %v540 = vpop.f32.mrb[0].mxu0
    %541 = vdwg.mxu0
    %vm542 = vcmask 80896
    %543 = vst.msk [vmem:[%s3] sm:$0xff] %vm542, %v529
    %544 = vst.msk [vmem:[%s3 + $0x8] sm:$0xff] %vm542, %v532
    %vm545 = vcmask 76800
    %546 = vst.msk [vmem:[%s3 + $0x10] sm:$0xf] %vm545, %v537
    // Predicated region
    $region18: #{fully_connected_forward.1} parent=1 // pred_check
      _
    $region19: #{fully_connected_forward.1} parent=1 // pred_check_branch
      %548 = sbr.rel (0) target = $region21
    $region20: #{fully_connected_forward.1} parent=1 // pred_region
      _
    $region21: #{fully_connected_forward.1} parent=1 // pred_fallthru
      _
    // Predicated region
    $region22: #{fully_connected_forward.1} parent=1 // pred_check
      _
    $region23: #{fully_connected_forward.1} parent=1 // pred_check_branch
      %550 = sbr.rel (0) target = $region25
    $region24: #{fully_connected_forward.1} parent=1 // pred_region
      _
    $region25: #{fully_connected_forward.1} parent=1 // pred_fallthru
      _
    %551 = vsyncpa [#allocation4], 1

</llo_original>
